<compile_context>
chip_gen: v7x
topology: tpu7x:2x2x1
jax: 0.10.0
libtpu: 0.0.40
codegen_flags: <defaults>
</compile_context>

<pallas_src>
import jax
import jax.numpy as jnp
from jax import lax
from jax.experimental import pallas as pl
from jax.experimental.pallas import tpu as pltpu


def attention_kernel(v_ref, qp_ref, wv_ref, wx_ref, bx_ref, o_ref):
    # v_ref : [B, Vf, S]   (S lane-dense; bf16 or f32)
    # qp_ref: [1, M, B]    precomputed q projection (f32), one column per image
    # wv_ref: [M, Vf]      wx_ref: [G, M]     bx_ref: [G, 1] (f32)
    # o_ref : [B, G, S]
    wv = wv_ref[...]
    wx = wx_ref[...]
    bx = bx_ref[...]                                     # [G, 1], f32
    qp = qp_ref[0].astype(jnp.float32)                   # [M, B], f32
    b_tile = v_ref.shape[0]
    # Hoisted: lane ids used to pick image b's q column via mask + lane-reduce
    # (avoids dynamic slicing along the lane dimension).
    lane_ids = lax.broadcasted_iota(jnp.int32, (1, b_tile), 1)

    def body(b, carry):
        v_b = v_ref[b]                                   # [Vf, S] dynamic major-axis load
        # 1x1 conv on v (no bias): [M, Vf] @ [Vf, S] -> [M, S], f32 accumulate.
        v_proj = jnp.dot(wv, v_b, preferred_element_type=jnp.float32)
        # tile_2d_over_nd: this image's q projection broadcast over all lanes (S).
        q_col = jnp.sum(jnp.where(lane_ids == b, qp, 0.0), axis=1, keepdims=True)  # [M, 1]
        x = jnp.maximum(v_proj + q_col, 0.0)             # relu epilogue in f32
        # 1x1 conv to glimpses (with bias): [G, M] @ [M, S] -> [G, S].
        out = jnp.dot(wx, x.astype(wx.dtype), preferred_element_type=jnp.float32) + bx
        o_ref[b] = out.astype(o_ref.dtype)               # dynamic major-axis store
        return carry

    # fori_loop (not a static Python unroll) bounds live ranges to one image's
    # [M, S] intermediates and keeps code size independent of b_tile.
    lax.fori_loop(0, b_tile, body, 0)


def _round_up(x, m):
    return -(-x // m) * m


def _chip_vmem_bytes():
    """Per-core VMEM capacity; falls back to the smallest current chip (v7x)."""
    try:
        cap = getattr(pltpu.get_tpu_info(), "vmem_capacity_bytes", None)
        if cap:
            return int(cap)
    except Exception:
        pass
    return 64 << 20


def _vmem_estimate(b_tile, Vf, S, M, G, in_isz, out_isz):
    """Conservative VMEM footprint for one grid step (Pallas double-buffers every spec)."""
    Sp, Vfp = _round_up(S, 128), _round_up(Vf, 16)
    Mp, Gp = _round_up(M, 16), _round_up(G, 16)
    tiles = 2 * b_tile * Vfp * Sp * in_isz + 2 * b_tile * Gp * Sp * out_isz
    weights = 2 * (Mp * _round_up(Vf, 128) + Gp * _round_up(M, 128)) * in_isz
    qp = 2 * Mp * 128 * 4                      # q-proj tile, lane-padded, f32
    bias = 2 * 8 * 128 * 4
    interm = 2 * Mp * Sp * 4                   # one image's f32 v_proj / x at a time
    return tiles + weights + qp + bias + interm + (2 << 20)


def _max_b_tile_for_budget(budget, Vf, S, M, G, in_isz, out_isz):
    base = _vmem_estimate(0, Vf, S, M, G, in_isz, out_isz)
    per_b = _vmem_estimate(1, Vf, S, M, G, in_isz, out_isz) - base
    return int(max(1, (budget - base) // max(per_b, 1)))


def _pick_b_tile(N, vmem_cap_bt):
    """Largest exact divisor of N within caps; prefer an even number of grid steps."""
    cap = max(1, min(int(vmem_cap_bt), 32, N // 2 if N >= 2 else 1))
    best = 1
    for t in range(cap, 0, -1):
        if N % t == 0:
            if (N // t) % 2 == 0:       # even #steps keeps both v7x TCs balanced
                return t
            best = max(best, t)
    return best


def attention_forward(v, q, params, *, b_tile=None, compute_dtype=jnp.bfloat16):
    """v: [N, v_features, H, W] (NCHW), q: [N, q_features] -> [N, glimpses, H, W]."""
    wv, wq, bq, wx, bx = params                          # PyTorch layouts
    N, Vf, H, W = v.shape
    S = H * W
    M, _Qf = wq.shape
    G = wx.shape[0]

    # Hoisted q projection: one [N,Qf]@[Qf,M] matmul for the whole batch (f32).
    q_proj = (q @ wq.T + bq).astype(jnp.float32)         # [N, M]

    in_dtype = v.dtype if compute_dtype is None else jnp.dtype(compute_dtype)
    in_isz = jnp.dtype(in_dtype).itemsize
    out_isz = jnp.dtype(v.dtype).itemsize

    # Generation-aware tiling: size the batch tile from the chip's VMEM, keep an
    # exact divisor of N (no jnp.pad extra HBM pass) and >=2 grid steps.
    chip_vmem = _chip_vmem_bytes()
    if b_tile is None:
        budget = int(0.70 * chip_vmem)
        b_tile = _pick_b_tile(N, _max_b_tile_for_budget(budget, Vf, S, M, G, in_isz, out_isz))
    else:
        b_tile = max(1, min(int(b_tile), N))
        while N % b_tile:                                # snap down to a divisor of N
            b_tile -= 1
    n_blk = N // b_tile

    # NCHW -> [N, Vf, S]: pure reshape, no transpose, no extra HBM pass.
    v_nsc = v.reshape(N, Vf, S)
    # [N, M] -> [n_blk, M, b_tile]: tiny transpose so each image's q projection
    # is a ready-made column inside the kernel.
    qp_blocks = jnp.transpose(q_proj.reshape(n_blk, b_tile, M), (0, 2, 1))

    wv_c, wx_c = wv, wx
    if compute_dtype is not None:                        # default: bf16 MXU operands
        v_nsc = v_nsc.astype(compute_dtype)
        wv_c = wv.astype(compute_dtype)
        wx_c = wx.astype(compute_dtype)
    bx2 = bx.reshape(G, 1).astype(jnp.float32)

    # VMEM limit clamped to the chip (never request more than ~85% of physical).
    est = _vmem_estimate(b_tile, Vf, S, M, G, in_isz, out_isz)
    vmem_limit = int(min(int(0.85 * chip_vmem), max(32 << 20, 2 * est)))
    vmem_limit = max(vmem_limit, int(est))

    flops = 2 * N * S * (Vf * M + M * G)
    bytes_accessed = (N * Vf * S * in_isz + N * G * S * out_isz
                      + (M * Vf + G * M) * in_isz + N * M * 4)

    out = pl.pallas_call(
        attention_kernel,
        out_shape=jax.ShapeDtypeStruct((N, G, S), v.dtype),
        grid_spec=pltpu.PrefetchScalarGridSpec(
            num_scalar_prefetch=0,
            grid=(n_blk,),
            in_specs=[
                pl.BlockSpec((b_tile, Vf, S), lambda n: (n, 0, 0)),
                pl.BlockSpec((1, M, b_tile), lambda n: (n, 0, 0)),
                pl.BlockSpec((M, Vf), lambda n: (0, 0)),
                pl.BlockSpec((G, M), lambda n: (0, 0)),
                pl.BlockSpec((G, 1), lambda n: (0, 0)),
            ],
            out_specs=pl.BlockSpec((b_tile, G, S), lambda n: (n, 0, 0)),
        ),
        compiler_params=pltpu.CompilerParams(
            dimension_semantics=("parallel",),
            vmem_limit_bytes=vmem_limit),
        cost_estimate=pl.CostEstimate(
            flops=flops, transcendentals=0, bytes_accessed=bytes_accessed),
    )(v_nsc, qp_blocks, wv_c, wx_c, bx2)

    # [N, G, S] -> [N, G, H, W]: free reshape (no transpose, no extra HBM pass).
    return out.reshape(N, G, H, W)


def init_params(key, v_features, q_features, mid_features, glimpses):
    """Deterministic synthetic init, PyTorch weight layouts (fan-in uniform)."""
    k1, k2, k3, k4, k5 = jax.random.split(key, 5)
    sv = 1.0 / v_features ** 0.5
    sq = 1.0 / q_features ** 0.5
    sm = 1.0 / mid_features ** 0.5
    wv = jax.random.uniform(k1, (mid_features, v_features), jnp.float32, -sv, sv)
    wq = jax.random.uniform(k2, (mid_features, q_features), jnp.float32, -sq, sq)
    bq = jax.random.uniform(k3, (mid_features,), jnp.float32, -sq, sq)
    wx = jax.random.uniform(k4, (glimpses, mid_features), jnp.float32, -sm, sm)
    bx = jax.random.uniform(k5, (glimpses,), jnp.float32, -sm, sm)
    return (wv, wq, bq, wx, bx)


def reference_forward(v, q, params, compute_dtype=None):
    """Pure-JAX reference; compute_dtype matches the kernel's operand casting."""
    wv, wq, bq, wx, bx = params
    if compute_dtype is not None:
        v = v.astype(compute_dtype)
        wv = wv.astype(compute_dtype)
        wx = wx.astype(compute_dtype)
    q_proj = (q @ wq.T + bq).astype(jnp.float32)                     # [N, M]
    v_proj = jnp.einsum('nchw,mc->nmhw', v, wv, preferred_element_type=jnp.float32)
    x = jax.nn.relu(v_proj + q_proj[:, :, None, None])
    x = x.astype(wx.dtype)
    out = jnp.einsum('nmhw,gm->nghw', x, wx, preferred_element_type=jnp.float32)
    return out + bx[None, :, None, None].astype(jnp.float32)


if __name__ == "__main__":
    # Dropout p=0.0 in the reference module -> identity (nothing to emulate).
    key = jax.random.PRNGKey(0)
    N, Vf, Qf, M, G, H, W = 4, 16, 24, 32, 2, 8, 8

    kv, kq, kp = jax.random.split(key, 3)
    v = jax.random.normal(kv, (N, Vf, H, W), jnp.float32)
    q = jax.random.normal(kq, (N, Qf), jnp.float32)
    params = init_params(kp, Vf, Qf, M, G)

    # Exact-precision path (f32 operands): tight check against the f32 reference.
    out_f32 = jax.block_until_ready(attention_forward(v, q, params, compute_dtype=None))
    assert out_f32.shape == (N, G, H, W)
    assert jnp.allclose(out_f32, reference_forward(v, q, params), atol=1e-4, rtol=1e-4)

    # Default path (bf16 matmul operands, f32 accumulation/epilogue): check
    # against a matched-precision reference.
    out_bf16 = jax.block_until_ready(attention_forward(v, q, params))
    assert out_bf16.shape == (N, G, H, W)
    assert jnp.allclose(out_bf16, reference_forward(v, q, params, jnp.bfloat16),
                        atol=1e-2, rtol=1e-2)
    print("KERNEL_OK")
</pallas_src>

<mosaic_0001>
module attributes {stable_mosaic.version = 11 : i64} {
  func.func @attention_kernel(%arg0: i32, %arg1: memref<2x16x64xf32, #tpu.memory_space<vmem>>, %arg2: memref<1x32x2xf32, #tpu.memory_space<vmem>>, %arg3: memref<32x16xf32, #tpu.memory_space<vmem>>, %arg4: memref<2x32xf32, #tpu.memory_space<vmem>>, %arg5: memref<2x1xf32, #tpu.memory_space<vmem>>, %arg6: memref<2x2x64xf32, #tpu.memory_space<vmem>>) attributes {dimension_semantics = [#tpu.dimension_semantics<parallel>], iteration_bounds = array<i64: 2>, scalar_prefetch = 0 : i64, scratch_operands = 0 : i64, tpu.core_type = #tpu.core_type<tc>, window_params = [{transform_indices = @transform_0, window_bounds = array<i64: 2, 16, 64>}, {transform_indices = @transform_1, window_bounds = array<i64: 1, 32, 2>}, {pipeline_mode = #tpu.pipeline_mode<synchronous>, transform_indices = @transform_2, window_bounds = array<i64: 32, 16>}, {pipeline_mode = #tpu.pipeline_mode<synchronous>, transform_indices = @transform_3, window_bounds = array<i64: 2, 32>}, {pipeline_mode = #tpu.pipeline_mode<synchronous>, transform_indices = @transform_4, window_bounds = array<i64: 2, 1>}, {transform_indices = @transform_5, window_bounds = array<i64: 2, 2, 64>}]} {
    %c0 = arith.constant 0 : index
    %c0_0 = arith.constant 0 : index
    %0 = vector.load %arg3[%c0, %c0_0] : memref<32x16xf32, #tpu.memory_space<vmem>>, vector<32x16xf32>
    %c0_1 = arith.constant 0 : index
    %c0_2 = arith.constant 0 : index
    %1 = vector.load %arg4[%c0_1, %c0_2] : memref<2x32xf32, #tpu.memory_space<vmem>>, vector<2x32xf32>
    %c0_3 = arith.constant 0 : index
    %c0_4 = arith.constant 0 : index
    %2 = vector.load %arg5[%c0_3, %c0_4] : memref<2x1xf32, #tpu.memory_space<vmem>>, vector<2x1xf32>
    %c0_5 = arith.constant 0 : index
    %c0_6 = arith.constant 0 : index
    %c0_7 = arith.constant 0 : index
    %3 = vector.load %arg2[%c0_5, %c0_6, %c0_7] : memref<1x32x2xf32, #tpu.memory_space<vmem>>, vector<1x32x2xf32>
    %4 = vector.shape_cast %3 : vector<1x32x2xf32> to vector<32x2xf32>
    %5 = tpu.iota {dimensions = array<i32: 1>} : vector<1x2xi32>
    %c0_i32 = arith.constant 0 : i32
    %c2_i32 = arith.constant 2 : i32
    %6 = arith.addi %c0_i32, %c2_i32 : i32
    %c1_i32 = arith.constant 1 : i32
    scf.for %arg7 = %c0_i32 to %6 step %c1_i32  : i32 {
      %7 = arith.index_cast %arg7 : i32 to index
      %c0_9 = arith.constant 0 : index
      %c0_10 = arith.constant 0 : index
      %8 = vector.load %arg1[%7, %c0_9, %c0_10] : memref<2x16x64xf32, #tpu.memory_space<vmem>>, vector<1x16x64xf32>
      %9 = vector.shape_cast %8 : vector<1x16x64xf32> to vector<16x64xf32>
      %cst = arith.constant dense<0.000000e+00> : vector<32x64xf32>
      %10 = tpu.matmul %0, %9, %cst {dimension_numbers = #tpu.dot_dimension_numbers<[1], [0], [0], [1], [0, 0, 1, 1], [], []>} : vector<32x16xf32>, vector<16x64xf32>, vector<32x64xf32> -> vector<32x64xf32>
      %11 = vector.broadcast %arg7 : i32 to vector<1x2xi32>
      %12 = arith.cmpi eq, %5, %11 : vector<1x2xi32>
      %cst_11 = arith.constant 0.000000e+00 : f32
      %13 = vector.shape_cast %12 : vector<1x2xi1> to vector<1x2xi1>
      %14 = vector.broadcast %13 : vector<1x2xi1> to vector<32x2xi1>
      %15 = vector.broadcast %cst_11 : f32 to vector<32x2xf32>
      %16 = arith.select %14, %4, %15 : vector<32x2xi1>, vector<32x2xf32>
      %cst_12 = arith.constant dense<0.000000e+00> : vector<32xf32>
      %17 = vector.multi_reduction <add>, %16, %cst_12 [1] : vector<32x2xf32> to vector<32xf32>
      %18 = vector.shape_cast %17 : vector<32xf32> to vector<32x1xf32>
      %19 = vector.broadcast %18 : vector<32x1xf32> to vector<32x64xf32>
      %20 = arith.addf %10, %19 : vector<32x64xf32>
      %cst_13 = arith.constant 0.000000e+00 : f32
      %21 = vector.broadcast %cst_13 : f32 to vector<32x64xf32>
      %22 = arith.maximumf %20, %21 : vector<32x64xf32>
      %cst_14 = arith.constant dense<0.000000e+00> : vector<2x64xf32>
      %23 = tpu.matmul %1, %22, %cst_14 {dimension_numbers = #tpu.dot_dimension_numbers<[1], [0], [0], [1], [0, 0, 1, 1], [], []>} : vector<2x32xf32>, vector<32x64xf32>, vector<2x64xf32> -> vector<2x64xf32>
      %24 = vector.broadcast %2 : vector<2x1xf32> to vector<2x64xf32>
      %25 = arith.addf %23, %24 : vector<2x64xf32>
      %26 = arith.index_cast %arg7 : i32 to index
      %c0_15 = arith.constant 0 : index
      %c0_16 = arith.constant 0 : index
      %27 = vector.load %arg6[%26, %c0_15, %c0_16] : memref<2x2x64xf32, #tpu.memory_space<vmem>>, vector<1x2x64xf32>
      %28 = vector.shape_cast %27 : vector<1x2x64xf32> to vector<2x64xf32>
      %29 = vector.shape_cast %25 : vector<2x64xf32> to vector<1x2x64xf32>
      tpu.vector_store %arg6[%26, %c0_15, %c0_16], %29 {strides = array<i32>} : memref<2x2x64xf32, #tpu.memory_space<vmem>>, vector<1x2x64xf32>,
    }
    %c2_i32_8 = arith.constant 2 : i32
    return
  }
  func.func @transform_0(%arg0: i32) -> (i32, i32, i32) {
    %c0_i32 = arith.constant 0 : i32
    %c0_i32_0 = arith.constant 0 : i32
    %c0_i32_1 = arith.constant 0 : i32
    return %arg0, %c0_i32, %c0_i32_0 : i32, i32, i32
  }
  func.func @transform_1(%arg0: i32) -> (i32, i32, i32) {
    %c0_i32 = arith.constant 0 : i32
    %c0_i32_0 = arith.constant 0 : i32
    %c0_i32_1 = arith.constant 0 : i32
    return %arg0, %c0_i32, %c0_i32_0 : i32, i32, i32
  }
  func.func @transform_2(%arg0: i32) -> (i32, i32) {
    %c0_i32 = arith.constant 0 : i32
    %c0_i32_0 = arith.constant 0 : i32
    %c0_i32_1 = arith.constant 0 : i32
    return %c0_i32, %c0_i32_0 : i32, i32
  }
  func.func @transform_3(%arg0: i32) -> (i32, i32) {
    %c0_i32 = arith.constant 0 : i32
    %c0_i32_0 = arith.constant 0 : i32
    %c0_i32_1 = arith.constant 0 : i32
    return %c0_i32, %c0_i32_0 : i32, i32
  }
  func.func @transform_4(%arg0: i32) -> (i32, i32) {
    %c0_i32 = arith.constant 0 : i32
    %c0_i32_0 = arith.constant 0 : i32
    %c0_i32_1 = arith.constant 0 : i32
    return %c0_i32, %c0_i32_0 : i32, i32
  }
  func.func @transform_5(%arg0: i32) -> (i32, i32, i32) {
    %c0_i32 = arith.constant 0 : i32
    %c0_i32_0 = arith.constant 0 : i32
    %c0_i32_1 = arith.constant 0 : i32
    return %arg0, %c0_i32, %c0_i32_0 : i32, i32, i32
  }
}

</mosaic_0001>

<llo_original>
// kernel: tpu_custom_call.1
$region0: #{tpu_custom_call.1}
  #allocation0 [shape = 'u32[]', space=smem, size = 0x4, offset = 0x4, fixed_abs, tag = 'smem constant byte address 0x4 - core index']
  #allocation1 [shape = 'u32[144,128]{1,0:T(1,128)}', space=vmem, size = 0x12000, scoped, tag = 'internal scratch']
  %s0 = inlined_call_operand.vmem [shape: f32[4,16,64], index: 0, kind: input, shape index: {}]
  %s1 = inlined_call_operand.vmem [shape: f32[2,32,2], index: 1, kind: input, shape index: {}]
  %s2 = inlined_call_operand.vmem [shape: f32[32,16], index: 2, kind: input, shape index: {}]
  %s3 = inlined_call_operand.vmem [shape: f32[2,32], index: 3, kind: input, shape index: {}]
  %s4 = inlined_call_operand.vmem [shape: f32[2,1], index: 4, kind: input, shape index: {}]
  %s5 = inlined_call_operand.hbm [shape: f32[4,2,64], index: 5, kind: output, shape index: {}]
  %s6 = sld [smem:[#allocation0]]
  $region60: #{tpu_custom_call.1} parent=0
    _
  %s8 = ssub.s32 1, %s6
  %s9 = scalar_select 0, %s8, %s6
  $region1: #{tpu_custom_call.1} parent=0
    #allocation2 [shape = 'u8[4096]{0}', space=vmem, size = 0x1000, scoped, tag = 'output window, operand 0']
    #allocation3 [shape = 's32[2]{0}', space=sflag, size = 0x8, scoped, tag = 'scoped memory for tpu_custom_call.1']
    %10 = vsyncpa [#allocation3], 0
    %s11 = scalar_lea.sflag [#allocation3], 1
    %12 = vsyncpa %s11, 0
    loop: start=0, step=1, limit=4
    $region2: #{tpu_custom_call.1} parent=1 // loop_pre_header
      _
    $region3: #{tpu_custom_call.1} parent=1 // loop_header
      %s14 = sphi 0, %s18
      %p15 = scmp.ge.s32.totalorder %s14, 4
      %s24 = sphi 0, %s26
      %s27 = sphi 0, %s24
      %s28 = sphi 0, %s27
      %s44 = sphi 0, %s28
      %s50 = sphi 0, %s52
      %s53 = sphi 0, %s50
      %s54 = sphi 0, %s53
      %s70 = sphi 0, %s54
      %s74 = sphi 0, %s74
      %s76 = sphi 0, %s74
      %s77 = sphi 0, %s76
      %s91 = sphi 0, %s77
      %s95 = sphi 0, %s95
      %s97 = sphi 0, %s95
      %s98 = sphi 0, %s97
      %s112 = sphi 0, %s98
      %s116 = sphi 0, %s116
      %s118 = sphi 0, %s116
      %s119 = sphi 0, %s118
      %s133 = sphi 0, %s119
      %s139 = sphi 0, %s141
      %s142 = sphi 0, %s139
      %s143 = sphi 0, %s142
      %s159 = sphi 0, %s143
    $region4: #{tpu_custom_call.1} parent=1 // loop_header_branch
      %17 = sbr.rel (%p15) target = $region8
    $region5: #{tpu_custom_call.1} parent=1 // loop_body
      %s19 = ssub.s32 %s14, 1
      %s20 = ssub.s32 %s14, 2
      %s21 = sadd.s32 %s14, 1
      %s22 = ssub.s32 %s14, %s21
      %p23 = scmp.eq.s32.totalorder %s22, 0
      %s25 = sadd.s32 %s24, 1
      %s26 = scalar_select %p23, %s24, %s25
      %p29 = pneg %p23
      %p30 = scmp.eq.s32.totalorder %s14, 1
      %p31 = por %p29, %p30
      %p32 = scmp.ne.s32.totalorder %s24, %s27
      %p33 = scmp.eq.s32.totalorder %s14, 0
      %p34 = por %p32, %p33
      %p35 = scmp.ne.s32.totalorder %s24, %s27
      %p36 = scmp.eq.s32.totalorder %s19, 1
      %p37 = por %p35, %p36
      %p38 = scmp.ne.s32.totalorder %s27, %s28
      %p39 = scmp.eq.s32.totalorder %s19, 0
      %p40 = por %p38, %p39
      %p41 = scmp.ne.s32.totalorder %s27, %s28
      %p42 = scmp.eq.s32.totalorder %s20, 1
      %p43 = por %p41, %p42
      %p45 = scmp.ne.s32.totalorder %s28, %s44
      %p46 = scmp.eq.s32.totalorder %s20, 0
      %p47 = por %p45, %p46
      %s48 = ssub.s32 %s14, %s21
      %p49 = scmp.eq.s32.totalorder %s48, 0
      %s51 = sadd.s32 %s50, 1
      %s52 = scalar_select %p49, %s50, %s51
      %p55 = pneg %p49
      %p56 = scmp.eq.s32.totalorder %s14, 1
      %p57 = por %p55, %p56
      %p58 = scmp.ne.s32.totalorder %s50, %s53
      %p59 = scmp.eq.s32.totalorder %s14, 0
      %p60 = por %p58, %p59
      %p61 = scmp.ne.s32.totalorder %s50, %s53
      %p62 = scmp.eq.s32.totalorder %s19, 1
      %p63 = por %p61, %p62
      %p64 = scmp.ne.s32.totalorder %s53, %s54
      %p65 = scmp.eq.s32.totalorder %s19, 0
      %p66 = por %p64, %p65
      %p67 = scmp.ne.s32.totalorder %s53, %s54
      %p68 = scmp.eq.s32.totalorder %s20, 1
      %p69 = por %p67, %p68
      %p71 = scmp.ne.s32.totalorder %s54, %s70
      %p72 = scmp.eq.s32.totalorder %s20, 0
      %p73 = por %p71, %p72
      %s75 = sadd.s32 %s74, 1
      %p78 = scmp.eq.s32.totalorder %s14, 1
      %p79 = scmp.ne.s32.totalorder %s74, %s76
      %p80 = scmp.eq.s32.totalorder %s14, 0
      %p81 = por %p79, %p80
      %p82 = scmp.ne.s32.totalorder %s74, %s76
      %p83 = scmp.eq.s32.totalorder %s19, 1
      %p84 = por %p82, %p83
      %p85 = scmp.ne.s32.totalorder %s76, %s77
      %p86 = scmp.eq.s32.totalorder %s19, 0
      %p87 = por %p85, %p86
      %p88 = scmp.ne.s32.totalorder %s76, %s77
      %p89 = scmp.eq.s32.totalorder %s20, 1
      %p90 = por %p88, %p89
      %p92 = scmp.ne.s32.totalorder %s77, %s91
      %p93 = scmp.eq.s32.totalorder %s20, 0
      %p94 = por %p92, %p93
      %s96 = sadd.s32 %s95, 1
      %p99 = scmp.eq.s32.totalorder %s14, 1
      %p100 = scmp.ne.s32.totalorder %s95, %s97
      %p101 = scmp.eq.s32.totalorder %s14, 0
      %p102 = por %p100, %p101
      %p103 = scmp.ne.s32.totalorder %s95, %s97
      %p104 = scmp.eq.s32.totalorder %s19, 1
      %p105 = por %p103, %p104
      %p106 = scmp.ne.s32.totalorder %s97, %s98
      %p107 = scmp.eq.s32.totalorder %s19, 0
      %p108 = por %p106, %p107
      %p109 = scmp.ne.s32.totalorder %s97, %s98
      %p110 = scmp.eq.s32.totalorder %s20, 1
      %p111 = por %p109, %p110
      %p113 = scmp.ne.s32.totalorder %s98, %s112
      %p114 = scmp.eq.s32.totalorder %s20, 0
      %p115 = por %p113, %p114
      %s117 = sadd.s32 %s116, 1
      %p120 = scmp.eq.s32.totalorder %s14, 1
      %p121 = scmp.ne.s32.totalorder %s116, %s118
      %p122 = scmp.eq.s32.totalorder %s14, 0
      %p123 = por %p121, %p122
      %p124 = scmp.ne.s32.totalorder %s116, %s118
      %p125 = scmp.eq.s32.totalorder %s19, 1
      %p126 = por %p124, %p125
      %p127 = scmp.ne.s32.totalorder %s118, %s119
      %p128 = scmp.eq.s32.totalorder %s19, 0
      %p129 = por %p127, %p128
      %p130 = scmp.ne.s32.totalorder %s118, %s119
      %p131 = scmp.eq.s32.totalorder %s20, 1
      %p132 = por %p130, %p131
      %p134 = scmp.ne.s32.totalorder %s119, %s133
      %p135 = scmp.eq.s32.totalorder %s20, 0
      %p136 = por %p134, %p135
      %s137 = ssub.s32 %s14, %s21
      %p138 = scmp.eq.s32.totalorder %s137, 0
      %s140 = sadd.s32 %s139, 1
      %s141 = scalar_select %p138, %s139, %s140
      %p144 = pneg %p138
      %p145 = scmp.eq.s32.totalorder %s14, 1
      %p146 = por %p144, %p145
      %p147 = scmp.ne.s32.totalorder %s139, %s142
      %p148 = scmp.eq.s32.totalorder %s14, 0
      %p149 = por %p147, %p148
      %p150 = scmp.ne.s32.totalorder %s139, %s142
      %p151 = scmp.eq.s32.totalorder %s19, 1
      %p152 = por %p150, %p151
      %p153 = scmp.ne.s32.totalorder %s142, %s143
      %p154 = scmp.eq.s32.totalorder %s19, 0
      %p155 = por %p153, %p154
      %p156 = scmp.ne.s32.totalorder %s142, %s143
      %p157 = scmp.eq.s32.totalorder %s20, 1
      %p158 = por %p156, %p157
      %p160 = scmp.ne.s32.totalorder %s143, %s159
      %p161 = scmp.eq.s32.totalorder %s20, 0
      %p162 = por %p160, %p161
      %p163 = scmp.le.s32.totalorder 1, %s14
      %p164 = scmp.lt.s32.totalorder %s14, 3
      %p165 = pnand %p163, %p164
      %p166 = pneg %p165
      // Predicated region
      $region9: #{tpu_custom_call.1} parent=5 // pred_check
        _
      $region10: #{tpu_custom_call.1} parent=5 // pred_check_branch
        %168 = sbr.rel (%p165) target = $region12
      $region11: #{tpu_custom_call.1} parent=5 // pred_region
        %s169 = ssub.s32 %s14, 1
        // Predicated region
        $region13: #{tpu_custom_call.1} parent=11 // pred_check
          %p170 = pneg %p87
        $region14: #{tpu_custom_call.1} parent=11 // pred_check_branch
          %172 = sbr.rel (%p170) target = $region16
        $region15: #{tpu_custom_call.1} parent=11 // pred_region
          _
        $region16: #{tpu_custom_call.1} parent=11 // pred_fallthru
          _
        // Predicated region
        $region17: #{tpu_custom_call.1} parent=11 // pred_check
          %p173 = pneg %p108
        $region18: #{tpu_custom_call.1} parent=11 // pred_check_branch
          %175 = sbr.rel (%p173) target = $region20
        $region19: #{tpu_custom_call.1} parent=11 // pred_region
          _
        $region20: #{tpu_custom_call.1} parent=11 // pred_fallthru
          _
        // Predicated region
        $region21: #{tpu_custom_call.1} parent=11 // pred_check
          %p176 = pneg %p129
        $region22: #{tpu_custom_call.1} parent=11 // pred_check_branch
          %178 = sbr.rel (%p176) target = $region24
        $region23: #{tpu_custom_call.1} parent=11 // pred_region
          _
        $region24: #{tpu_custom_call.1} parent=11 // pred_fallthru
          _
      $region12: #{tpu_custom_call.1} parent=5 // pred_fallthru
        _
      %p179 = scmp.lt.s32.totalorder %s14, 2
      // Predicated region
      $region25: #{tpu_custom_call.1} parent=5 // pred_check
        %p180 = pneg %p179
      $region26: #{tpu_custom_call.1} parent=5 // pred_check_branch
        %182 = sbr.rel (%p180) target = $region28
      $region27: #{tpu_custom_call.1} parent=5 // pred_region
        // Predicated region
        $region29: #{tpu_custom_call.1} parent=27 // pred_check
          %p183 = pneg %p34
        $region30: #{tpu_custom_call.1} parent=27 // pred_check_branch
          %185 = sbr.rel (%p183) target = $region32
        $region31: #{tpu_custom_call.1} parent=27 // pred_region
          %s186 = smul.u32 2, %s14
          %p187 = scmp.lt.s32.totalorder %s186, 3
          %s188 = scalar_select %p187, %s186, 3
          %s189 = smul.addr %s188, 2
          %s190 = smul.addr %s189, 8
          %s191 = scalar_lea.vmem %s0, %s190
          %s192 = smul.u32 2, %s14
        $region32: #{tpu_custom_call.1} parent=27 // pred_fallthru
          _
        // Predicated region
        $region33: #{tpu_custom_call.1} parent=27 // pred_check
          %p193 = pneg %p60
        $region34: #{tpu_custom_call.1} parent=27 // pred_check_branch
          %195 = sbr.rel (%p193) target = $region36
        $region35: #{tpu_custom_call.1} parent=27 // pred_region
          %p196 = scmp.lt.s32.totalorder %s14, 1
          %s197 = scalar_select %p196, %s14, 1
          %s198 = smul.addr %s197, 4
          %s199 = smul.addr %s198, 8
          %s200 = scalar_lea.vmem %s1, %s199
        $region36: #{tpu_custom_call.1} parent=27 // pred_fallthru
          _
      $region28: #{tpu_custom_call.1} parent=5 // pred_fallthru
        _
      %p201 = scmp.le.s32.totalorder 1, %s14
      %p202 = scmp.lt.s32.totalorder %s14, 3
      %p203 = pnand %p201, %p202
      %p204 = pneg %p203
      // Predicated region
      $region37: #{tpu_custom_call.1} parent=5 // pred_check
        _
      $region38: #{tpu_custom_call.1} parent=5 // pred_check_branch
        %206 = sbr.rel (%p203) target = $region40
      $region39: #{tpu_custom_call.1} parent=5 // pred_region
        %s207 = ssub.s32 %s14, 1
        %s208 = smul.u32 2, %s19
        %p209 = scmp.lt.s32.totalorder %s208, 3
        %s210 = scalar_select %p209, %s208, 3
        %s211 = smul.addr %s210, 2
        %s212 = smul.addr %s211, 8
        %s213 = scalar_lea.vmem %s0, %s212
        %p214 = pneg %p40
        %p215 = pneg %p37
        %p216 = scmp.lt.s32.totalorder %s19, 1
        %s217 = scalar_select %p216, %s19, 1
        %s218 = smul.addr %s217, 4
        %s219 = smul.addr %s218, 8
        %s220 = scalar_lea.vmem %s1, %s219
        %p221 = pneg %p66
        %p222 = pneg %p63
        %p223 = pneg %p87
        %p224 = pneg %p84
        %p225 = pneg %p108
        %p226 = pneg %p105
        %p227 = pneg %p129
        %p228 = pneg %p126
        %p229 = pneg %p155
        %p230 = pneg %p152
        %s231 = sand.u32 %s142, 1
        %s232 = scalar_lea.sflag [#allocation3], %s231
        %s233 = sand.u32 %s142, 1
        %s234 = smul.addr %s233, 4
        %s235 = scalar_lea.vmem [#allocation2], %s234
        %s236 = smul.u32 2, %s19
        %p237 = scmp.lt.s32.totalorder %s236, 3
        %s238 = scalar_select %p237, %s236, 3
        %s239 = smul.addr %s238, 2
        %s240 = smul.addr %s239, 8
        %s241 = scalar_lea.vmem %s0, %s240
        %s242 = smul.u32 2, %s19
        %p243 = scmp.lt.s32.totalorder %s19, 1
        %s244 = scalar_select %p243, %s19, 1
        %s245 = smul.addr %s244, 4
        %s246 = smul.addr %s245, 8
        %s247 = scalar_lea.vmem %s1, %s246
        %s248 = smul.u32 2, %s19
        %v249 = vld [vmem:[%s2] sm:$0xff]
        %v250 = vld [vmem:[%s2 + $0x8] sm:$0xff]
        %v251 = vld [vmem:[%s2 + $0x10] sm:$0xff]
        %v252 = vld [vmem:[%s2 + $0x18] sm:$0xff]
        %v253 = vld [vmem:[%s3] sm:$0x3]
        %v254 = vld [vmem:[%s4] sm:$0x3]
        %v255 = vld [vmem:[%s247] sm:$0xff]
        %v256 = vld [vmem:[%s247 + $0x8] sm:$0xff]
        %v257 = vld [vmem:[%s247 + $0x10] sm:$0xff]
        %v258 = vld [vmem:[%s247 + $0x18] sm:$0xff]
        %v259 = vlaneseq
        %v260 = vand.u32 %v259, 127
        loop: start=0, step=1, limit=2
        $region41: #{tpu_custom_call.1} parent=39 // loop_pre_header
          _
        $region42: #{tpu_custom_call.1} parent=39 // loop_header
          %s262 = sphi 0, %s266
          %p263 = scmp.ge.s32.totalorder %s262, 2
        $region43: #{tpu_custom_call.1} parent=39 // loop_header_branch
          %265 = sbr.rel (%p263) target = $region47
        $region44: #{tpu_custom_call.1} parent=39 // loop_body
          %s267 = smul.u32 %s262, 16
          %s268 = scalar_lea.vmem %s241, %s267
          %v269 = vld [vmem:[%s268] sm:$0xff]
          %v270 = vld [vmem:[%s268 + $0x8] sm:$0xff]
          %v271 = vstv %s262
          %vm272 = vcmp.eq.s32.totalorder %v260, %v271
          %v273 = vsel %vm272, 1, 0
          %vm274 = vcmp.eq.s32.totalorder %v273, 1
          %v275 = vsel %vm274, %v255, 0.0
          %v276 = vsel %vm274, %v256, 0.0
          %v277 = vsel %vm274, %v257, 0.0
          %v278 = vsel %vm274, %v258, 0.0
          %vm279 = vcmask 15360
          %v280 = vsel %vm279, %v275, 0.0
          %281 = vadd.xlane.f32.xlu0 %v280
          %v282 = vpop.xlane.xlu0 %281
          %v283 = vsel %vm279, %v276, 0.0
          %284 = vadd.xlane.f32.xlu0 %v283
          %v285 = vpop.xlane.xlu0 %284
          %v286 = vsel %vm279, %v277, 0.0
          %287 = vadd.xlane.f32.xlu0 %v286
          %v288 = vpop.xlane.xlu0 %287
          %v289 = vsel %vm279, %v278, 0.0
          %290 = vadd.xlane.f32.xlu0 %v289
          %v291 = vpop.xlane.xlu0 %290
          %vm292 = vcmask 130048
          %v294 = vsel %vm292, %v249, 0
          %v297 = vsel %vm292, %v250, 0
          %v300 = vsel %vm292, %v251, 0
          %v303 = vsel %vm292, %v252, 0
          %305 = vmatprep.subr.mxu0 0.0
          %306 = vmatpush1.msra.mxu0 %v269
          %307 = vmatprep.subr.mxu0 0.0
          %308 = vmatpush1.msra.mxu0 %v270
          %309 = vmatprep.subr.mxu0 0.0
          %310 = vmatpush1.msra.mxu0 0.0
          %311 = vmatprep.subr.mxu0 0.0
          %312 = vmatpush1.msra.mxu0 0.0
          %313 = vmatprep.subr.mxu0 0.0
          %314 = vmatpush1.msra.mxu0 0.0
          %315 = vmatprep.subr.mxu0 0.0
          %316 = vmatpush1.msra.mxu0 0.0
          %317 = vmatprep.subr.mxu0 0.0
          %318 = vmatpush1.msra.mxu0 0.0
          %319 = vmatprep.subr.mxu0 0.0
          %320 = vmatpush1.msra.mxu0 0.0
          %321 = vmatprep.subr.mxu0 0.0
          %322 = vmatpush1.msra.mxu0 0.0
          %323 = vmatprep.subr.mxu0 0.0
          %324 = vmatpush1.msra.mxu0 0.0
          %325 = vmatprep.subr.mxu0 0.0
          %326 = vmatpush1.msra.mxu0 0.0
          %327 = vmatprep.subr.mxu0 0.0
          %328 = vmatpush1.msra.mxu0 0.0
          %329 = vmatprep.subr.mxu0 0.0
          %330 = vmatpush1.msra.mxu0 0.0
          %331 = vmatprep.subr.mxu0 0.0
          %332 = vmatpush1.msra.mxu0 0.0
          %333 = vmatprep.subr.mxu0 0.0
          %334 = vmatpush1.msra.mxu0 0.0
          %335 = vmatprep.subr.mxu0 0.0
          %336 = vmatpush1.msra.mxu0 0.0
          %337 = vmatprep.subr.mxu0 0.0
          %338 = vmatpush1.msra.mxu0 0.0
          %339 = vmatprep.subr.mxu0 0.0
          %340 = vmatpush1.msra.mxu0 0.0
          %341 = vmatprep.subr.mxu0 0.0
          %342 = vmatpush1.msra.mxu0 0.0
          %343 = vmatprep.subr.mxu0 0.0
          %344 = vmatpush1.msra.mxu0 0.0
          %345 = vmatprep.subr.mxu0 0.0
          %346 = vmatpush1.msra.mxu0 0.0
          %347 = vmatprep.subr.mxu0 0.0
          %348 = vmatpush1.msra.mxu0 0.0
          %349 = vmatprep.subr.mxu0 0.0
          %350 = vmatpush1.msra.mxu0 0.0
          %351 = vmatprep.subr.mxu0 0.0
          %352 = vmatpush1.msra.mxu0 0.0
          %353 = vmatprep.subr.mxu0 0.0
          %354 = vmatpush1.msra.mxu0 0.0
          %355 = vmatprep.subr.mxu0 0.0
          %356 = vmatpush1.msra.mxu0 0.0
          %357 = vmatprep.subr.mxu0 0.0
          %358 = vmatpush1.msra.mxu0 0.0
          %359 = vmatprep.subr.mxu0 0.0
          %360 = vmatpush1.msra.mxu0 0.0
          %361 = vmatprep.subr.mxu0 0.0
          %362 = vmatpush1.msra.mxu0 0.0
          %363 = vmatprep.subr.mxu0 0.0
          %364 = vmatpush1.msra.mxu0 0.0
          %365 = vmatprep.subr.mxu0 0.0
          %366 = vmatpush1.msra.mxu0 0.0
          %367 = vmatprep.subr.mxu0 0.0
          %368 = vmatpush1.msra.mxu0 0.0
          %369 = vmatprep.mubr.f32.mxu0 0.0
          %370 = vmatmul.mubr.f32.gmra.mrb[0].mxu0 %v294
          %v371 = vpop.f32.mrb[0].mxu0
          %v372 = vadd.f32 %v282, %v371
          %v373 = vpop.f32.mrb[0].mxu0
          %374 = vmatprep.mubr.f32.mxu0 0.0
          %375 = vmatmul.mubr.f32.gmra.mrb[0].mxu0 %v297
          %v376 = vpop.f32.mrb[0].mxu0
          %v377 = vadd.f32 %v285, %v376
          %v378 = vpop.f32.mrb[0].mxu0
          %379 = vmatprep.mubr.f32.mxu0 0.0
          %380 = vmatmul.mubr.f32.gmra.mrb[0].mxu0 %v300
          %v381 = vpop.f32.mrb[0].mxu0
          %v382 = vadd.f32 %v288, %v381
          %v383 = vpop.f32.mrb[0].mxu0
          %384 = vmatprep.mubr.f32.mxu0 0.0
          %385 = vmatmul.mubr.f32.gmra.mrb[0].mxu0 %v303
          %v386 = vpop.f32.mrb[0].mxu0
          %v387 = vadd.f32 %v291, %v386
          %v388 = vpop.f32.mrb[0].mxu0
          %389 = vdwg.mxu0
          %v390 = vmax.f32 %v372, 0.0
          %v391 = vmax.f32 %v377, 0.0
          %v392 = vmax.f32 %v382, 0.0
          %v393 = vmax.f32 %v387, 0.0
          %395 = vset.pattern.permute.xlu0 0
          %396 = vperm.xlu0 %395, %v254
          %v397 = vpop.permute.xlu0 %396
          %vm399 = vcmask 261120
          %v401 = vsel %vm399, %v253, 0
          %403 = vmatprep.subr.mxu0 0.0
          %404 = vmatpush1.msra.mxu0 %v390
          %405 = vmatprep.subr.mxu0 0.0
          %406 = vmatpush1.msra.mxu0 %v391
          %407 = vmatprep.subr.mxu0 0.0
          %408 = vmatpush1.msra.mxu0 %v392
          %409 = vmatprep.subr.mxu0 0.0
          %410 = vmatpush1.msra.mxu0 %v393
          %411 = vmatprep.subr.mxu0 0.0
          %412 = vmatpush1.msra.mxu0 0.0
          %413 = vmatprep.subr.mxu0 0.0
          %414 = vmatpush1.msra.mxu0 0.0
          %415 = vmatprep.subr.mxu0 0.0
          %416 = vmatpush1.msra.mxu0 0.0
          %417 = vmatprep.subr.mxu0 0.0
          %418 = vmatpush1.msra.mxu0 0.0
          %419 = vmatprep.subr.mxu0 0.0
          %420 = vmatpush1.msra.mxu0 0.0
          %421 = vmatprep.subr.mxu0 0.0
          %422 = vmatpush1.msra.mxu0 0.0
          %423 = vmatprep.subr.mxu0 0.0
          %424 = vmatpush1.msra.mxu0 0.0
          %425 = vmatprep.subr.mxu0 0.0
          %426 = vmatpush1.msra.mxu0 0.0
          %427 = vmatprep.subr.mxu0 0.0
          %428 = vmatpush1.msra.mxu0 0.0
          %429 = vmatprep.subr.mxu0 0.0
          %430 = vmatpush1.msra.mxu0 0.0
          %431 = vmatprep.subr.mxu0 0.0
          %432 = vmatpush1.msra.mxu0 0.0
          %433 = vmatprep.subr.mxu0 0.0
          %434 = vmatpush1.msra.mxu0 0.0
          %435 = vmatprep.subr.mxu0 0.0
          %436 = vmatpush1.msra.mxu0 0.0
          %437 = vmatprep.subr.mxu0 0.0
          %438 = vmatpush1.msra.mxu0 0.0
          %439 = vmatprep.subr.mxu0 0.0
          %440 = vmatpush1.msra.mxu0 0.0
          %441 = vmatprep.subr.mxu0 0.0
          %442 = vmatpush1.msra.mxu0 0.0
          %443 = vmatprep.subr.mxu0 0.0
          %444 = vmatpush1.msra.mxu0 0.0
          %445 = vmatprep.subr.mxu0 0.0
          %446 = vmatpush1.msra.mxu0 0.0
          %447 = vmatprep.subr.mxu0 0.0
          %448 = vmatpush1.msra.mxu0 0.0
          %449 = vmatprep.subr.mxu0 0.0
          %450 = vmatpush1.msra.mxu0 0.0
          %451 = vmatprep.subr.mxu0 0.0
          %452 = vmatpush1.msra.mxu0 0.0
          %453 = vmatprep.subr.mxu0 0.0
          %454 = vmatpush1.msra.mxu0 0.0
          %455 = vmatprep.subr.mxu0 0.0
          %456 = vmatpush1.msra.mxu0 0.0
          %457 = vmatprep.subr.mxu0 0.0
          %458 = vmatpush1.msra.mxu0 0.0
          %459 = vmatprep.subr.mxu0 0.0
          %460 = vmatpush1.msra.mxu0 0.0
          %461 = vmatprep.subr.mxu0 0.0
          %462 = vmatpush1.msra.mxu0 0.0
          %463 = vmatprep.subr.mxu0 0.0
          %464 = vmatpush1.msra.mxu0 0.0
          %465 = vmatprep.subr.mxu0 0.0
          %466 = vmatpush1.msra.mxu0 0.0
          %467 = vmatprep.mubr.f32.mxu0 0.0
          %468 = vmatmul.mubr.f32.gmra.mrb[0].mxu0 %v401
          %v469 = vpop.f32.mrb[0].mxu0
          %v470 = vadd.f32 %v397, %v469
          %v471 = vpop.f32.mrb[0].mxu0
          %472 = vdwg.mxu0
          %s473 = smul.u32 %s262, 2
          %s474 = scalar_lea.vmem %s235, %s473 [#allocation2]
          %vm475 = vcmask 517120
          %476 = vst.msk [vmem:[%s474] sm:$0x3] %vm475, %v470
        $region45: #{tpu_custom_call.1} parent=39 // loop_footer
          %s266 = sadd.s32 1, %s262
        $region46: #{tpu_custom_call.1} parent=39 // loop_footer_branch
          %261 = sbr.rel target = $region42
        $region47: #{tpu_custom_call.1} parent=39 // loop_exit
          _
        %s477 = sand.u32 %s142, 1
        %s478 = scalar_lea.sflag [#allocation3], %s477
        %s479 = sand.u32 %s142, 1
        %s480 = smul.addr %s479, 4
        %s481 = scalar_lea.vmem [#allocation2], %s480
        // Predicated region
        $region48: #{tpu_custom_call.1} parent=39 // pred_check
          %p482 = pneg %p152
        $region49: #{tpu_custom_call.1} parent=39 // pred_check_branch
          %484 = sbr.rel (%p482) target = $region51
        $region50: #{tpu_custom_call.1} parent=39 // pred_region
          %s485 = smul.u32 2, %s19
          %s487 = ssub.s32 64, 64
          %488 = vsyncadd %s478, %s487
          %s489 = smul.addr %s485, 32
          %s490 = scalar_lea.hbm %s5, %s489
          %s491 = sshll.u32 %s481, 4
          %s492 = int_to_ptr.vmem [resolvable:$true] %s491
          %497 = dma.vmem_to_hbm [thread:$0]  %s492, 64, %s490, %s478, 32, 32, 2
        $region51: #{tpu_custom_call.1} parent=39 // pred_fallthru
          _
      $region40: #{tpu_custom_call.1} parent=5 // pred_fallthru
        _
      %p498 = scmp.le.s32.totalorder 2, %s14
      // Predicated region
      $region52: #{tpu_custom_call.1} parent=5 // pred_check
        %p499 = pneg %p498
      $region53: #{tpu_custom_call.1} parent=5 // pred_check_branch
        %501 = sbr.rel (%p499) target = $region55
      $region54: #{tpu_custom_call.1} parent=5 // pred_region
        %s502 = ssub.s32 %s14, 2
        // Predicated region
        $region56: #{tpu_custom_call.1} parent=54 // pred_check
          %p503 = pneg %p158
        $region57: #{tpu_custom_call.1} parent=54 // pred_check_branch
          %505 = sbr.rel (%p503) target = $region59
        $region58: #{tpu_custom_call.1} parent=54 // pred_region
          %s506 = sand.u32 %s143, 1
          %s507 = scalar_lea.sflag [#allocation3], %s506
          %s508 = sand.u32 %s143, 1
          %s509 = smul.addr %s508, 4
          %s510 = scalar_lea.vmem [#allocation2], %s509
          %511 = dma.done %s507, 64
        $region59: #{tpu_custom_call.1} parent=54 // pred_fallthru
          _
      $region55: #{tpu_custom_call.1} parent=5 // pred_fallthru
        _
    $region6: #{tpu_custom_call.1} parent=1 // loop_footer
      %s18 = sadd.s32 1, %s14
    $region7: #{tpu_custom_call.1} parent=1 // loop_footer_branch
      %13 = sbr.rel target = $region3
    $region8: #{tpu_custom_call.1} parent=1 // loop_exit
      _
    %512 = vsyncpa [#allocation3], 1
    %s513 = scalar_lea.sflag [#allocation3], 1
    %514 = vsyncpa %s513, 1

</llo_original>
